<compile_context>
chip_gen: v7x
topology: tpu7x:2x2x1
jax: 0.10.0
libtpu: 0.0.40
codegen_flags: <defaults>
</compile_context>

<pallas_src>
import jax
import jax.numpy as jnp
from jax import lax
from jax.experimental import pallas as pl
from jax.experimental.pallas import tpu as pltpu

_BN_EPS = 1e-5
_VMEM_LIMIT = 32 * 1024 * 1024      # safe on v5e/v6e (128 MiB phys) and v7x (64 MiB phys)


def _round_up(x, m):
    return ((x + m - 1) // m) * m


# ----------------------------------------------------------------------------
# Plain-JAX glue: FPS / ball query / grouping (data-dependent gathers)
# ----------------------------------------------------------------------------

def square_distance(src, dst):
    # src [B,N,C], dst [B,M,C] -> [B,N,M]
    d = -2.0 * jnp.einsum("bnc,bmc->bnm", src, dst)
    d = d + jnp.sum(src ** 2, -1)[:, :, None]
    d = d + jnp.sum(dst ** 2, -1)[:, None, :]
    return d


def index_points(points, idx):
    # points [B,N,C], idx [B,...] -> [B,...,C]
    return jax.vmap(lambda p, i: p[i])(points, idx)


def farthest_point_sample(points, sample_num):
    # TODO(synk): torch reference seeds FPS with torch.randint; we use a
    # deterministic start index 0 so results are reproducible. The FPS loop is
    # inherently sequential (sample_num iterations of an O(B*N) argmax).
    B, N, _ = points.shape

    def body(i, carry):
        centroids, distance, farthest = carry
        centroids = centroids.at[:, i].set(farthest)
        centroid = index_points(points, farthest[:, None])        # [B,1,3]
        dist = jnp.sum((points - centroid) ** 2, -1)               # [B,N]
        distance = jnp.minimum(distance, dist)
        farthest = jnp.argmax(distance, -1).astype(jnp.int32)
        return centroids, distance, farthest

    init = (jnp.zeros((B, sample_num), jnp.int32),
            jnp.full((B, N), 1e10, jnp.float32),
            jnp.zeros((B,), jnp.int32))
    centroids, _, _ = lax.fori_loop(0, sample_num, body, init)
    return centroids


def query_ball_point(radius, k, points, sampled):
    B, N, _ = points.shape
    S = sampled.shape[1]
    sqrdists = square_distance(sampled, points)                    # [B,S,N]
    idx = jnp.broadcast_to(jnp.arange(N, dtype=jnp.int32), (B, S, N))
    idx = jnp.where(sqrdists > radius ** 2, N, idx)
    # k smallest indices in ascending order == sort(...)[:k]; top_k on the
    # negated values avoids the full O(N log N) sort of the reference.
    neg_topk, _ = lax.top_k(-idx, k)
    group_idx = -neg_topk
    group_first = jnp.broadcast_to(group_idx[:, :, :1], (B, S, k))
    group_idx = jnp.where(group_idx == N, group_first, group_idx)
    return group_idx


def sample_and_group(num_fps, radius, k, xyz, features):
    B, N, C = xyz.shape
    fps_idx = farthest_point_sample(xyz, num_fps)                  # [B,S]
    fps_xyz = index_points(xyz, fps_idx)                           # [B,S,3]
    ball_idx = query_ball_point(radius, k, xyz, fps_xyz)           # [B,S,k]
    ball_xyz = index_points(xyz, ball_idx)                         # [B,S,k,3]
    norm_xyz = ball_xyz - fps_xyz[:, :, None, :]
    if features is not None:
        ball_feat = index_points(features, ball_idx)               # [B,S,k,D]
        new_feat = jnp.concatenate([norm_xyz, ball_feat], axis=-1)
    else:
        new_feat = norm_xyz
    return fps_xyz, new_feat


def sample_and_group_all(xyz, features):
    B, N, C = xyz.shape
    fps_xyz = jnp.zeros((B, 1, C), xyz.dtype)
    norm_xyz = xyz[:, None, :, :]
    if features is not None:
        new_feat = jnp.concatenate([norm_xyz, features[:, None, :, :]], axis=-1)
    else:
        new_feat = norm_xyz
    return fps_xyz, new_feat


# ----------------------------------------------------------------------------
# Pallas kernels
# ----------------------------------------------------------------------------

def _mm_stats_kernel(x_ref, w_ref, y_ref, stats_ref):
    """y = x @ w (bf16 operands on MXU, f32 accumulation) + per-tile BN stats."""
    y = jnp.dot(x_ref[...], w_ref[...], preferred_element_type=jnp.float32)
    y_ref[...] = y
    s1 = jnp.sum(y, axis=0, keepdims=True)          # (1, C) per-channel sum
    s2 = jnp.sum(y * y, axis=0, keepdims=True)      # (1, C) per-channel sum of squares
    stats_ref[...] = jnp.concatenate([s1, s2], axis=0).reshape(1, 2, -1)


def _make_bn_relu_mm_stats_kernel(tile_r, rows_real, rows_padded):
    """h = relu(y_prev*scale+shift) (masked for padded rows); y = h @ w; stats."""
    need_mask = rows_padded > rows_real

    def kernel(yp_ref, scale_ref, shift_ref, w_ref, y_ref, stats_ref):
        h = jnp.maximum(yp_ref[...] * scale_ref[...] + shift_ref[...], 0.0)
        if need_mask:
            row = (pl.program_id(0) * tile_r
                   + lax.broadcasted_iota(jnp.int32, (tile_r, 1), 0))
            h = jnp.where(row < rows_real, h, 0.0)   # keep padded rows == 0
        y = jnp.dot(h.astype(jnp.bfloat16), w_ref[...],
                    preferred_element_type=jnp.float32)
        y_ref[...] = y
        s1 = jnp.sum(y, axis=0, keepdims=True)
        s2 = jnp.sum(y * y, axis=0, keepdims=True)
        stats_ref[...] = jnp.concatenate([s1, s2], axis=0).reshape(1, 2, -1)

    return kernel


def _bn_relu_max_kernel(y_ref, scale_ref, shift_ref, out_ref):
    """Final layer: normalize+affine+ReLU then max over the k neighbours."""
    h = jnp.maximum(y_ref[...] * scale_ref[...] + shift_ref[...], 0.0)
    out_ref[...] = jnp.max(h, axis=1)


# ----------------------------------------------------------------------------
# Wrapper: tiled shared-MLP + BatchNorm(batch stats) + ReLU + k-max
# ----------------------------------------------------------------------------

def _choose_tile_m(M, K, c_max_pad):
    """Groups-per-tile so the double-buffered f32 activations fit the VMEM budget."""
    budget = 8 * 1024 * 1024
    per_row = 4 * (2 * c_max_pad) * 2 + 6 * c_max_pad   # in+out dbl-buffered + temps
    rows = max(8 * K, budget // per_row)
    tm = max(8, (rows // K) // 8 * 8)
    tm = min(tm, max(8, _round_up(M, 8)))
    return int(tm)


def _bn_fold(stats, gamma, beta, count, c_pad, eps):
    """Reduce per-tile partial sums -> per-channel BN scale/shift (training mode)."""
    s = jnp.sum(stats, axis=0)                       # (2, c_pad)
    mean = s[0] / float(count)
    var = jnp.maximum(s[1] / float(count) - mean * mean, 0.0)   # biased var (PyTorch)
    inv = lax.rsqrt(var + eps)
    c = gamma.shape[-1]
    g = jnp.pad(gamma.reshape(-1), (0, c_pad - c))   # padded channels: gamma = 0
    b = jnp.pad(beta.reshape(-1), (0, c_pad - c))    #                  beta  = 0
    scale = g * inv
    shift = b - mean * scale
    return scale, shift


def pointnet_mlp_max(features, params, eps=_BN_EPS):
    """features: [B, S, K, C_in] channels-last (f32). Returns [B, S, C_last]."""
    B, S, K, C_in = features.shape
    M = B * S
    R_real = M * K
    c_outs = [w.shape[1] for (w, _b, _g, _bt) in params]
    c_pads = [_round_up(c, 128) for c in c_outs]     # lane-dense layer outputs

    TILE_M = _choose_tile_m(M, K, max(c_pads))
    M_pad = _round_up(M, TILE_M)
    TILE_R = TILE_M * K                              # multiple of 8 (TILE_M is)
    R_pad = M_pad * K
    n_tiles = R_pad // TILE_R

    # Flatten in XLA, pad rows with zeros (excluded from stats: zero rows
    # contribute 0 to sum/sumsq and we divide by the real row count).
    x = features.reshape(R_real, C_in)
    if R_pad > R_real:
        x = jnp.pad(x, ((0, R_pad - R_real), (0, 0)))
    x = x.astype(jnp.bfloat16)                       # halve HBM->VMEM bytes

    def cparams():
        return pltpu.CompilerParams(
            dimension_semantics=("parallel",),       # megacore sharding on v7x
            vmem_limit_bytes=_VMEM_LIMIT)

    # ---- layer 0: matmul + partial BN stats --------------------------------
    w0, _b0, g0, bt0 = params[0]
    c0p = c_pads[0]
    w0p = jnp.pad(w0, ((0, 0), (0, c0p - c_outs[0]))).astype(jnp.bfloat16)
    y, stats = pl.pallas_call(
        _mm_stats_kernel,
        out_shape=(jax.ShapeDtypeStruct((R_pad, c0p), jnp.float32),
                   jax.ShapeDtypeStruct((n_tiles, 2, c0p), jnp.float32)),
        grid=(n_tiles,),
        in_specs=[pl.BlockSpec((TILE_R, C_in), lambda i: (i, 0)),
                  pl.BlockSpec((C_in, c0p), lambda i: (0, 0))],    # resident weight
        out_specs=(pl.BlockSpec((TILE_R, c0p), lambda i: (i, 0)),
                   pl.BlockSpec((1, 2, c0p), lambda i: (i, 0, 0))),
        compiler_params=cparams(),
        cost_estimate=pl.CostEstimate(
            flops=2 * R_pad * C_in * c0p, transcendentals=0,
            bytes_accessed=(R_pad * C_in * 2 + C_in * c0p * 2
                            + R_pad * c0p * 4 + n_tiles * 2 * c0p * 4)),
    )(x, w0p)
    scale, shift = _bn_fold(stats, g0, bt0, R_real, c0p, eps)

    # ---- layers 1..L-1: BN+ReLU of previous y, matmul, partial stats -------
    for li in range(1, len(params)):
        w, _b, g, bt = params[li]
        cin_p, cout_p = c_pads[li - 1], c_pads[li]
        wp = jnp.pad(w, ((0, cin_p - w.shape[0]),
                         (0, cout_p - c_outs[li]))).astype(jnp.bfloat16)
        kernel = _make_bn_relu_mm_stats_kernel(TILE_R, R_real, R_pad)
        y, stats = pl.pallas_call(
            kernel,
            out_shape=(jax.ShapeDtypeStruct((R_pad, cout_p), jnp.float32),
                       jax.ShapeDtypeStruct((n_tiles, 2, cout_p), jnp.float32)),
            grid=(n_tiles,),
            in_specs=[pl.BlockSpec((TILE_R, cin_p), lambda i: (i, 0)),
                      pl.BlockSpec((1, cin_p), lambda i: (0, 0)),
                      pl.BlockSpec((1, cin_p), lambda i: (0, 0)),
                      pl.BlockSpec((cin_p, cout_p), lambda i: (0, 0))],
            out_specs=(pl.BlockSpec((TILE_R, cout_p), lambda i: (i, 0)),
                       pl.BlockSpec((1, 2, cout_p), lambda i: (i, 0, 0))),
            compiler_params=cparams(),
            cost_estimate=pl.CostEstimate(
                flops=2 * R_pad * cin_p * cout_p, transcendentals=0,
                bytes_accessed=(R_pad * cin_p * 4 + cin_p * cout_p * 2
                                + R_pad * cout_p * 4 + n_tiles * 2 * cout_p * 4)),
        )(y, scale.reshape(1, cin_p), shift.reshape(1, cin_p), wp)
        scale, shift = _bn_fold(stats, g, bt, R_real, cout_p, eps)

    # ---- final: BN + ReLU + max over the k neighbours -----------------------
    c_last, c_last_p = c_outs[-1], c_pads[-1]
    y3 = y.reshape(M_pad, K, c_last_p)               # XLA reshape (contiguous)
    n_tiles_m = M_pad // TILE_M
    out = pl.pallas_call(
        _bn_relu_max_kernel,
        out_shape=jax.ShapeDtypeStruct((M_pad, c_last_p), jnp.float32),
        grid=(n_tiles_m,),
        in_specs=[pl.BlockSpec((TILE_M, K, c_last_p), lambda i: (i, 0, 0)),
                  pl.BlockSpec((1, 1, c_last_p), lambda i: (0, 0, 0)),
                  pl.BlockSpec((1, 1, c_last_p), lambda i: (0, 0, 0))],
        out_specs=pl.BlockSpec((TILE_M, c_last_p), lambda i: (i, 0)),
        compiler_params=cparams(),
        cost_estimate=pl.CostEstimate(
            flops=3 * M_pad * K * c_last_p, transcendentals=0,
            bytes_accessed=M_pad * K * c_last_p * 4 + M_pad * c_last_p * 4),
    )(y3, scale.reshape(1, 1, c_last_p), shift.reshape(1, 1, c_last_p))

    return out[:M, :c_last].reshape(B, S, c_last)    # drop padded rows/channels


# ----------------------------------------------------------------------------
# SA module (Set Abstraction)
# ----------------------------------------------------------------------------

class SA:
    def __init__(self, num_fps, radius, k, in_channel, mlp,
                 group_all=False, key=None):
        self.num_fps = num_fps
        self.radius = radius
        self.k = k
        self.group_all = group_all
        if key is None:
            key = jax.random.PRNGKey(0)
        self.params = []
        last = in_channel
        for out_c in mlp:
            key, kw, kb, kg, kbt = jax.random.split(key, 5)
            # nn.Conv2d(last, out_c, 1): weight [out_c, last, 1, 1] -> [last, out_c]
            w = 0.1 * jax.random.normal(kw, (last, out_c), jnp.float32)
            # Conv bias exists in the PyTorch module but is exactly cancelled by
            # the training-mode BatchNorm mean subtraction; kept for parity,
            # unused in the fast path.
            b = 0.1 * jax.random.normal(kb, (1, out_c), jnp.float32)
            # nn.BatchNorm2d(out_c): affine gamma/beta
            g = 1.0 + 0.1 * jax.random.normal(kg, (1, out_c), jnp.float32)
            bt = 0.1 * jax.random.normal(kbt, (1, out_c), jnp.float32)
            self.params.append((w, b, g, bt))
            last = out_c

    def __call__(self, bpc, bpc_features):
        # bpc [B, 3, N], bpc_features [B, D, N] (PyTorch channels-first)
        xyz = jnp.transpose(bpc, (0, 2, 1))                        # [B,N,3]
        feat = (jnp.transpose(bpc_features, (0, 2, 1))
                if bpc_features is not None else None)             # [B,N,D]
        if self.group_all:
            fps_xyz, new_feat = sample_and_group_all(xyz, feat)
        else:
            fps_xyz, new_feat = sample_and_group(
                self.num_fps, self.radius, self.k, xyz, feat)
        # new_feat: [B, S, k, 3+D] channels-last; kernels consume it directly.
        x = pointnet_mlp_max(new_feat, self.params)                # [B,S,C_last]
        return (jnp.transpose(fps_xyz, (0, 2, 1)),                 # [B,3,S]
                jnp.transpose(x, (0, 2, 1)))                       # [B,C_last,S]


# ----------------------------------------------------------------------------

if __name__ == "__main__":
    key = jax.random.PRNGKey(0)
    k1, k2, k3 = jax.random.split(key, 3)

    B, N, D = 2, 16, 4
    bpc = jax.random.uniform(k1, (B, 3, N), jnp.float32)           # [B,3,N]
    bpc_features = jax.random.normal(k2, (B, D, N), jnp.float32)   # [B,D,N]

    sa = SA(num_fps=8, radius=0.5, k=4, in_channel=3 + D,
            mlp=[16, 32], group_all=False, key=k3)

    fps_xyz, feats = sa(bpc, bpc_features)
    fps_xyz = jax.block_until_ready(fps_xyz)
    feats = jax.block_until_ready(feats)

    assert fps_xyz.shape == (B, 3, 8)
    assert feats.shape == (B, 32, 8)
    assert bool(jnp.all(jnp.isfinite(fps_xyz))) and bool(jnp.all(jnp.isfinite(feats)))

    print("KERNEL_OK")
</pallas_src>

<mosaic_0001>
module attributes {stable_mosaic.version = 11 : i64} {
  func.func @_mm_stats_kernel(%arg0: i32, %arg1: memref<64x7xbf16, #tpu.memory_space<vmem>>, %arg2: memref<7x128xbf16, #tpu.memory_space<vmem>>, %arg3: memref<64x128xf32, #tpu.memory_space<vmem>>, %arg4: memref<1x2x128xf32, #tpu.memory_space<vmem>>) attributes {dimension_semantics = [#tpu.dimension_semantics<parallel>], iteration_bounds = array<i64: 1>, scalar_prefetch = 0 : i64, scratch_operands = 0 : i64, tpu.core_type = #tpu.core_type<tc>, window_params = [{transform_indices = @transform_0, window_bounds = array<i64: 64, 7>}, {pipeline_mode = #tpu.pipeline_mode<synchronous>, transform_indices = @transform_1, window_bounds = array<i64: 7, 128>}, {transform_indices = @transform_2, window_bounds = array<i64: 64, 128>}, {transform_indices = @transform_3, window_bounds = array<i64: 1, 2, 128>}]} {
    %c0 = arith.constant 0 : index
    %c0_0 = arith.constant 0 : index
    %0 = vector.load %arg1[%c0, %c0_0] : memref<64x7xbf16, #tpu.memory_space<vmem>>, vector<64x7xbf16>
    %c0_1 = arith.constant 0 : index
    %c0_2 = arith.constant 0 : index
    %1 = vector.load %arg2[%c0_1, %c0_2] : memref<7x128xbf16, #tpu.memory_space<vmem>>, vector<7x128xbf16>
    %cst = arith.constant dense<0.000000e+00> : vector<64x128xf32>
    %2 = tpu.matmul %0, %1, %cst {dimension_numbers = #tpu.dot_dimension_numbers<[1], [0], [0], [1], [0, 0, 1, 1], [], []>} : vector<64x7xbf16>, vector<7x128xbf16>, vector<64x128xf32> -> vector<64x128xf32>
    %c0_3 = arith.constant 0 : index
    %c0_4 = arith.constant 0 : index
    %3 = vector.load %arg3[%c0_3, %c0_4] : memref<64x128xf32, #tpu.memory_space<vmem>>, vector<64x128xf32>
    tpu.vector_store %arg3[%c0_3, %c0_4], %2 {strides = array<i32>} : memref<64x128xf32, #tpu.memory_space<vmem>>, vector<64x128xf32>,
    %cst_5 = arith.constant dense<0.000000e+00> : vector<128xf32>
    %4 = vector.multi_reduction <add>, %2, %cst_5 [0] : vector<64x128xf32> to vector<128xf32>
    %5 = vector.shape_cast %4 : vector<128xf32> to vector<1x128xf32>
    %6 = arith.mulf %2, %2 : vector<64x128xf32>
    %cst_6 = arith.constant dense<0.000000e+00> : vector<128xf32>
    %7 = vector.multi_reduction <add>, %6, %cst_6 [0] : vector<64x128xf32> to vector<128xf32>
    %8 = vector.shape_cast %7 : vector<128xf32> to vector<1x128xf32>
    %9 = tpu.concatenate %5, %8 in 0 : vector<1x128xf32>, vector<1x128xf32> -> vector<2x128xf32>
    %10 = vector.shape_cast %9 : vector<2x128xf32> to vector<1x2x128xf32>
    %c0_7 = arith.constant 0 : index
    %c0_8 = arith.constant 0 : index
    %c0_9 = arith.constant 0 : index
    %11 = vector.load %arg4[%c0_7, %c0_8, %c0_9] : memref<1x2x128xf32, #tpu.memory_space<vmem>>, vector<1x2x128xf32>
    tpu.vector_store %arg4[%c0_7, %c0_8, %c0_9], %10 {strides = array<i32>} : memref<1x2x128xf32, #tpu.memory_space<vmem>>, vector<1x2x128xf32>,
    return
  }
  func.func @transform_0(%arg0: i32) -> (i32, i32) {
    %c0_i32 = arith.constant 0 : i32
    %c0_i32_0 = arith.constant 0 : i32
    return %arg0, %c0_i32 : i32, i32
  }
  func.func @transform_1(%arg0: i32) -> (i32, i32) {
    %c0_i32 = arith.constant 0 : i32
    %c0_i32_0 = arith.constant 0 : i32
    %c0_i32_1 = arith.constant 0 : i32
    return %c0_i32, %c0_i32_0 : i32, i32
  }
  func.func @transform_2(%arg0: i32) -> (i32, i32) {
    %c0_i32 = arith.constant 0 : i32
    %c0_i32_0 = arith.constant 0 : i32
    return %arg0, %c0_i32 : i32, i32
  }
  func.func @transform_3(%arg0: i32) -> (i32, i32, i32) {
    %c0_i32 = arith.constant 0 : i32
    %c0_i32_0 = arith.constant 0 : i32
    %c0_i32_1 = arith.constant 0 : i32
    return %arg0, %c0_i32, %c0_i32_0 : i32, i32, i32
  }
}

</mosaic_0001>

<llo_original>
// kernel: tpu_custom_call.1
$region0: #{tpu_custom_call.1}
  #allocation0 [shape = 'u32[]', space=smem, size = 0x4, offset = 0x4, fixed_abs, tag = 'smem constant byte address 0x4 - core index']
  #allocation1 [shape = 'u32[144,128]{1,0:T(1,128)}', space=vmem, size = 0x12000, scoped, tag = 'internal scratch']
  %s0 = inlined_call_operand.vmem [shape: bf16[64,7], index: 0, kind: input, shape index: {}]
  %s1 = inlined_call_operand.vmem [shape: bf16[7,128], index: 1, kind: input, shape index: {}]
  %s2 = inlined_call_operand.hbm [shape: f32[64,128], index: 2, kind: output, shape index: {0}]
  %s3 = inlined_call_operand.hbm [shape: f32[1,2,128], index: 3, kind: output, shape index: {1}]
  %4 = xla_tuple %s2, %s3
  %s5 = sld [smem:[#allocation0]]
  $region26: #{tpu_custom_call.1} parent=0
    _
  %s7 = ssub.s32 1, %s5
  %s8 = scalar_select 0, %s7, %s5
  $region1: #{tpu_custom_call.1} parent=0
    #allocation2 [shape = 'u8[32768]{0}', space=vmem, size = 0x8000, scoped, tag = 'output window, operand 0, single buffered']
    #allocation3 [shape = 's32[1]{0}', space=sflag, size = 0x4, scoped, tag = 'scoped memory for tpu_custom_call.1']
    #allocation4 [shape = 'u8[1024]{0}', space=vmem, size = 0x400, scoped, tag = 'output window, operand 1, single buffered']
    #allocation5 [shape = 's32[1]{0}', space=sflag, size = 0x4, scoped, tag = 'scoped memory for tpu_custom_call.1']
    %9 = vsyncpa [#allocation3], 0
    %10 = vsyncpa [#allocation5], 0
    // Predicated region
    $region2: #{tpu_custom_call.1} parent=1 // pred_check
      _
    $region3: #{tpu_custom_call.1} parent=1 // pred_check_branch
      %12 = sbr.rel (0) target = $region5
    $region4: #{tpu_custom_call.1} parent=1 // pred_region
      _
    $region5: #{tpu_custom_call.1} parent=1 // pred_fallthru
      _
    // Predicated region
    $region6: #{tpu_custom_call.1} parent=1 // pred_check
      _
    $region7: #{tpu_custom_call.1} parent=1 // pred_check_branch
      %14 = sbr.rel (0) target = $region9
    $region8: #{tpu_custom_call.1} parent=1 // pred_region
      _
    $region9: #{tpu_custom_call.1} parent=1 // pred_fallthru
      _
    %v16 = vld [vmem:[%s0] sm:$0xf]
    %v17 = vld [vmem:[%s0 + $0x4] sm:$0xf]
    %v18 = vld [vmem:[%s0 + $0x8] sm:$0xf]
    %v19 = vld [vmem:[%s0 + $0xc] sm:$0xf]
    %v20 = vld [vmem:[%s0 + $0x10] sm:$0xf]
    %v21 = vld [vmem:[%s0 + $0x14] sm:$0xf]
    %v22 = vld [vmem:[%s0 + $0x18] sm:$0xf]
    %v23 = vld [vmem:[%s0 + $0x1c] sm:$0xf]
    %v24 = vld [vmem:[%s1] sm:$0xf]
    %v33 = vunpack.c.l.b16 %v16
    %v34 = vunpack.c.l.b16 %v17
    %v35 = vunpack.c.l.b16 %v18
    %v36 = vunpack.c.l.b16 %v19
    %v37 = vunpack.c.l.b16 %v20
    %v38 = vunpack.c.l.b16 %v21
    %v39 = vunpack.c.l.b16 %v22
    %v40 = vunpack.c.l.b16 %v23
    %v41 = vpack.c.b16 %v34, %v33
    %v42 = vpack.c.b16 %v36, %v35
    %v43 = vpack.c.b16 %v38, %v37
    %v44 = vpack.c.b16 %v40, %v39
    %vm45 = vcmask 56320
    %v47 = vsel %vm45, %v41, 0
    %v50 = vsel %vm45, %v42, 0
    %v53 = vsel %vm45, %v43, 0
    %v56 = vsel %vm45, %v44, 0
    %vm58 = vcmask 1042432
    %vm59 = vcmask 1043456
    %v60 = vsel %vm58, 4294967295, 65535
    %v61 = vsel %vm59, %v60, 0
    %v63 = vand.u32 %v24, %v61
    %65 = vmatprep.subr.bf16.mxu0 0
    %66 = vmatpush1.bf16.msra.mxu0 %v63
    %67 = vmatprep.subr.bf16.mxu0 0
    %68 = vmatpush1.bf16.msra.mxu0 0
    %69 = vmatprep.subr.bf16.mxu0 0
    %70 = vmatpush1.bf16.msra.mxu0 0
    %71 = vmatprep.subr.bf16.mxu0 0
    %72 = vmatpush1.bf16.msra.mxu0 0
    %73 = vmatprep.subr.bf16.mxu0 0
    %74 = vmatpush1.bf16.msra.mxu0 0
    %75 = vmatprep.subr.bf16.mxu0 0
    %76 = vmatpush1.bf16.msra.mxu0 0
    %77 = vmatprep.subr.bf16.mxu0 0
    %78 = vmatpush1.bf16.msra.mxu0 0
    %79 = vmatprep.subr.bf16.mxu0 0
    %80 = vmatpush1.bf16.msra.mxu0 0
    %81 = vmatprep.subr.bf16.mxu0 0
    %82 = vmatpush1.bf16.msra.mxu0 0
    %83 = vmatprep.subr.bf16.mxu0 0
    %84 = vmatpush1.bf16.msra.mxu0 0
    %85 = vmatprep.subr.bf16.mxu0 0
    %86 = vmatpush1.bf16.msra.mxu0 0
    %87 = vmatprep.subr.bf16.mxu0 0
    %88 = vmatpush1.bf16.msra.mxu0 0
    %89 = vmatprep.subr.bf16.mxu0 0
    %90 = vmatpush1.bf16.msra.mxu0 0
    %91 = vmatprep.subr.bf16.mxu0 0
    %92 = vmatpush1.bf16.msra.mxu0 0
    %93 = vmatprep.subr.bf16.mxu0 0
    %94 = vmatpush1.bf16.msra.mxu0 0
    %95 = vmatprep.subr.bf16.mxu0 0
    %96 = vmatpush1.bf16.msra.mxu0 0
    %97 = vmatprep.mubr.bf16.mxu0 0
    %98 = vmatmul.mubr.bf16.gmra.mrb[0].mxu0 %v47
    %v99 = vpop.f32.mrb[0].mxu0
    %v100 = vadd.f32 0.0, %v99
    %v101 = vpop.f32.mrb[0].mxu0
    %v102 = vpop.f32.mrb[0].mxu0
    %v103 = vadd.f32 0.0, %v102
    %v104 = vpop.f32.mrb[0].mxu0
    %105 = vmatprep.mubr.bf16.mxu0 0
    %106 = vmatmul.mubr.bf16.gmra.mrb[0].mxu0 %v50
    %v107 = vpop.f32.mrb[0].mxu0
    %v108 = vadd.f32 0.0, %v107
    %v109 = vpop.f32.mrb[0].mxu0
    %v110 = vpop.f32.mrb[0].mxu0
    %v111 = vadd.f32 0.0, %v110
    %v112 = vpop.f32.mrb[0].mxu0
    %113 = vmatprep.mubr.bf16.mxu0 0
    %114 = vmatmul.mubr.bf16.gmra.mrb[0].mxu0 %v53
    %v115 = vpop.f32.mrb[0].mxu0
    %v116 = vadd.f32 0.0, %v115
    %v117 = vpop.f32.mrb[0].mxu0
    %v118 = vpop.f32.mrb[0].mxu0
    %v119 = vadd.f32 0.0, %v118
    %v120 = vpop.f32.mrb[0].mxu0
    %121 = vmatprep.mubr.bf16.mxu0 0
    %122 = vmatmul.mubr.bf16.gmra.mrb[0].mxu0 %v56
    %v123 = vpop.f32.mrb[0].mxu0
    %v124 = vadd.f32 0.0, %v123
    %v125 = vpop.f32.mrb[0].mxu0
    %v126 = vpop.f32.mrb[0].mxu0
    %v127 = vadd.f32 0.0, %v126
    %v128 = vpop.f32.mrb[0].mxu0
    %129 = vdwg.mxu0
    %130 = vst [vmem:[#allocation2] sm:$0xff] %v100
    %131 = vst [vmem:[#allocation2 + $0x8] sm:$0xff] %v103
    %132 = vst [vmem:[#allocation2 + $0x10] sm:$0xff] %v108
    %133 = vst [vmem:[#allocation2 + $0x18] sm:$0xff] %v111
    %134 = vst [vmem:[#allocation2 + $0x20] sm:$0xff] %v116
    %135 = vst [vmem:[#allocation2 + $0x28] sm:$0xff] %v119
    %136 = vst [vmem:[#allocation2 + $0x30] sm:$0xff] %v124
    %137 = vst [vmem:[#allocation2 + $0x38] sm:$0xff] %v127
    %v138 = vadd.f32 %v100, %v103
    %v139 = vadd.f32 %v138, %v108
    %v140 = vadd.f32 %v139, %v111
    %v141 = vadd.f32 %v140, %v116
    %v142 = vadd.f32 %v141, %v119
    %v143 = vadd.f32 %v142, %v124
    %v144 = vadd.f32 %v143, %v127
    %v145 = vrot.slane %v144, 4
    %v146 = vadd.f32 %v144, %v145
    %v147 = vrot.slane %v146, 2
    %v148 = vadd.f32 %v146, %v147
    %v149 = vrot.slane %v148, 1
    %v150 = vadd.f32 %v148, %v149
    %v151 = vmul.f32 %v100, %v100
    %v152 = vmul.f32 %v103, %v103
    %v153 = vmul.f32 %v108, %v108
    %v154 = vmul.f32 %v111, %v111
    %v155 = vmul.f32 %v116, %v116
    %v156 = vmul.f32 %v119, %v119
    %v157 = vmul.f32 %v124, %v124
    %v158 = vmul.f32 %v127, %v127
    %v159 = vadd.f32 %v151, %v152
    %v160 = vadd.f32 %v159, %v153
    %v161 = vadd.f32 %v160, %v154
    %v162 = vadd.f32 %v161, %v155
    %v163 = vadd.f32 %v162, %v156
    %v164 = vadd.f32 %v163, %v157
    %v165 = vadd.f32 %v164, %v158
    %v166 = vrot.slane %v165, 4
    %v167 = vadd.f32 %v165, %v166
    %v168 = vrot.slane %v167, 2
    %v169 = vadd.f32 %v167, %v168
    %v170 = vrot.slane %v169, 1
    %v171 = vadd.f32 %v169, %v170
    %vm172 = vcmask 1040384
    %v173 = vsel %vm172, %v150, %v171
    %174 = vst [vmem:[#allocation4] sm:$0x3] %v173
    // Predicated region
    $region10: #{tpu_custom_call.1} parent=1 // pred_check
      _
    $region11: #{tpu_custom_call.1} parent=1 // pred_check_branch
      %176 = sbr.rel (0) target = $region13
    $region12: #{tpu_custom_call.1} parent=1 // pred_region
      %s178 = ssub.s32 1024, 1024
      %179 = vsyncadd [#allocation3], %s178
      %s180 = sshll.u32 [#allocation2], 4
      %s181 = int_to_ptr.vmem [resolvable:$true] %s180
      %186 = dma.vmem_to_hbm [thread:$0]  %s181, 1024, %s2, [#allocation3], 128, 128, 8
    $region13: #{tpu_custom_call.1} parent=1 // pred_fallthru
      _
    // Predicated region
    $region14: #{tpu_custom_call.1} parent=1 // pred_check
      _
    $region15: #{tpu_custom_call.1} parent=1 // pred_check_branch
      %188 = sbr.rel (0) target = $region17
    $region16: #{tpu_custom_call.1} parent=1 // pred_region
      %s190 = ssub.s32 32, 32
      %191 = vsyncadd [#allocation5], %s190
      %s193 = sshll.u32 [#allocation4], 4
      %s194 = int_to_ptr.vmem [resolvable:$true] %s193
      %196 = dma.vmem_to_hbm [thread:$0]  %s194, 32, %s3, [#allocation5]
    $region17: #{tpu_custom_call.1} parent=1 // pred_fallthru
      _
    // Predicated region
    $region18: #{tpu_custom_call.1} parent=1 // pred_check
      _
    $region19: #{tpu_custom_call.1} parent=1 // pred_check_branch
      %198 = sbr.rel (0) target = $region21
    $region20: #{tpu_custom_call.1} parent=1 // pred_region
      %199 = dma.done [#allocation3], 1024
    $region21: #{tpu_custom_call.1} parent=1 // pred_fallthru
      _
    // Predicated region
    $region22: #{tpu_custom_call.1} parent=1 // pred_check
      _
    $region23: #{tpu_custom_call.1} parent=1 // pred_check_branch
      %201 = sbr.rel (0) target = $region25
    $region24: #{tpu_custom_call.1} parent=1 // pred_region
      %202 = dma.done [#allocation5], 32
    $region25: #{tpu_custom_call.1} parent=1 // pred_fallthru
      _
    %203 = vsyncpa [#allocation3], 1
    %204 = vsyncpa [#allocation5], 1

</llo_original>
